<compile_context>
chip_gen: v5e
topology: v5e:2x2
jax: 0.10.0
libtpu: 0.0.40
codegen_flags: <defaults>
</compile_context>

<pallas_src>
import jax
import jax.numpy as jnp
from jax import lax
from jax.experimental import pallas as pl
from jax.experimental.pallas import tpu as pltpu


def _round_up(x, m):
    return ((x + m - 1) // m) * m


# Double-buffered Z byte budget (2 buffers).  ~8 MiB per Z DMA amortizes the
# ~0.35 us per-step cost while the whole working set (Z double buffer + E/T +
# two outputs + the [8, TILE_N] projection) stays well under the 32 MiB
# scoped-VMEM limit requested below — safe on v5e/v6e (128 MiB physical VMEM)
# and on v7x (64 MiB physical).
_Z_DOUBLE_BUFFER_BYTES = 16 * 1024 * 1024
# jnp.pad of Z forces a full HBM copy of Z; only do it when Z is tiny.
# Otherwise rely on Pallas' partial trailing block (all math is elementwise
# per sample, so garbage tail lanes never contaminate valid ones and their
# output writes are discarded).
_PAD_Z_MAX_BYTES = 1 * 1024 * 1024


def _choose_tile(n, row_bytes):
    n_ceil = _round_up(max(n, 1), 128)
    tile = (_Z_DOUBLE_BUFFER_BYTES // (2 * row_bytes)) // 128 * 128
    tile = max(tile, 128)
    tile = min(tile, n_ceil)
    # Keep >= 4 grid steps when N allows it: lets v7x's two TensorCores split
    # the "parallel" grid axis and keeps the DMA pipeline busy.
    steps_cap = _round_up(-(-n_ceil // 4), 128)
    return max(128, min(tile, steps_cap))


def _weibull_kernel(neg_icpt_ref, nab_ref, z_ref, et_ref, e_lh_ref, ls_ref):
    # neg_icpt_ref : SMEM f32[2]          = [-alpha0, -beta0]
    # nab_ref      : VMEM [8, D]          row 0 = -alpha, row 1 = -beta, rest 0
    # z_ref        : VMEM [TILE_N, D]     streamed Z tile
    # et_ref       : VMEM f32[2, TILE_N]  row 0 = E, row 1 = T (samples on lanes)
    # e_lh_ref     : VMEM f32[1, TILE_N]  E * log_hazard
    # ls_ref       : VMEM f32[1, TILE_N]  log_survival

    # Fused mat-vecs on the MXU, q @ k^T style (contraction on the minor dim
    # of both operands); result [8, TILE_N] has samples on the lane axis so
    # no in-kernel relayout of the big Z tile is needed.
    proj = lax.dot_general(
        nab_ref[...], z_ref[...],
        dimension_numbers=(((1,), (1,)), ((), ())),
        preferred_element_type=jnp.float32)

    log_scale = proj[0:1, :] + neg_icpt_ref[0]     # -alpha0 - Z @ alpha
    log_shape = proj[1:2, :] + neg_icpt_ref[1]     # -beta0  - Z @ beta

    e = et_ref[0:1, :]
    log_t = jnp.log(et_ref[1:2, :])
    scale = jnp.exp(log_scale)

    # Exact rearrangement of the reference:
    #   log_hazard = log_shape + log_scale + (scale - 1) * log_t
    #              = log_cum_hazard + (log_scale - log_t)
    log_cum_hazard = log_shape + scale * log_t
    log_hazard = log_cum_hazard + (log_scale - log_t)

    e_lh_ref[...] = e * log_hazard
    ls_ref[...] = -jnp.exp(log_cum_hazard)


def weibull_forward(E, T, Z, alpha0, alpha, beta0, beta):
    """Pallas forward pass.  E, T: [N]; Z: [N, D] (f32 or bf16);
    alpha/beta: [D]; alpha0/beta0: scalar (or shape [1]).
    Returns (E * log_hazard, log_survival), each [N] float32."""
    N, D = Z.shape
    D = max(D, 1)

    # bf16 fast path: if Z already lives in HBM as bf16, feed it straight to
    # the MXU (f32 accumulation) — halves the dominant HBM stream.
    if Z.dtype == jnp.float32 or Z.dtype == jnp.bfloat16:
        Zf = Z
    else:
        Zf = Z.astype(jnp.float32)
    row_bytes = D * Zf.dtype.itemsize

    tile = _choose_tile(N, row_bytes)
    grid_n = -(-N // tile)                 # ceil div
    n_pad = grid_n * tile

    pad_z = (n_pad != N) and (N * row_bytes <= _PAD_Z_MAX_BYTES)
    if pad_z:
        Zf = jnp.pad(Zf, ((0, n_pad - N), (0, 0)))
    # When Z is not padded, the outputs use the true N and the trailing
    # partial block's out-of-range writes are discarded by the pipeline.
    n_out = n_pad if pad_z else N

    # E and T travel as one [2, n_pad] array -> a single small DMA per step.
    # Padding the 1-D arrays is O(N) and keeps log(T)=0 / E=0 on padded lanes.
    Ef = jnp.pad(E.astype(jnp.float32).reshape(-1), (0, n_pad - N))
    Tf = jnp.pad(T.astype(jnp.float32).reshape(-1), (0, n_pad - N),
                 constant_values=1.0)
    ET = jnp.stack([Ef, Tf], axis=0)

    # Coefficient operand: row 0 = -alpha, row 1 = -beta (8 rows for sublane
    # alignment); matches Z's dtype so a bf16 Z stays a pure bf16 matmul.
    nab = jnp.zeros((8, D), Zf.dtype)
    nab = nab.at[0, :].set((-jnp.asarray(alpha, jnp.float32)).reshape(-1).astype(Zf.dtype))
    nab = nab.at[1, :].set((-jnp.asarray(beta, jnp.float32)).reshape(-1).astype(Zf.dtype))
    neg_icpt = -jnp.concatenate([
        jnp.asarray(alpha0, jnp.float32).reshape(1),
        jnp.asarray(beta0, jnp.float32).reshape(1)])

    z_db_bytes = 2 * tile * row_bytes
    vmem_limit = int(max(32 * 1024 * 1024, z_db_bytes + (16 << 20)))

    cost = pl.CostEstimate(
        flops=4 * N * D,                         # two fused mat-vecs
        transcendentals=3 * N,                   # 2x exp + 1x log per sample
        bytes_accessed=N * row_bytes + 4 * N * 4)  # Z + (E,T) in + 2 outs

    e_lh, ls = pl.pallas_call(
        _weibull_kernel,
        out_shape=(
            jax.ShapeDtypeStruct((1, n_out), jnp.float32),
            jax.ShapeDtypeStruct((1, n_out), jnp.float32),
        ),
        grid=(grid_n,),
        in_specs=[
            pl.BlockSpec(memory_space=pltpu.SMEM),         # [-alpha0, -beta0]
            pl.BlockSpec((8, D), lambda i: (0, 0)),        # coeffs (resident)
            pl.BlockSpec((tile, D), lambda i: (i, 0)),     # Z tile (pipelined)
            pl.BlockSpec((2, tile), lambda i: (0, i)),     # stacked E/T tile
        ],
        out_specs=(
            pl.BlockSpec((1, tile), lambda i: (0, i)),
            pl.BlockSpec((1, tile), lambda i: (0, i)),
        ),
        compiler_params=pltpu.CompilerParams(
            dimension_semantics=("parallel",),
            vmem_limit_bytes=vmem_limit),
        cost_estimate=cost,
    )(neg_icpt, nab, Zf, ET)

    return e_lh[0, :N], ls[0, :N]


def weibull_forward_ref(E, T, Z, alpha0, alpha, beta0, beta):
    """Plain-JAX reference matching the PyTorch semantics."""
    log_shape = -beta0 - Z @ beta
    log_scale = -alpha0 - Z @ alpha
    scale = jnp.exp(log_scale)
    log_t = jnp.log(T)
    log_hazard = log_shape + log_scale + (scale - 1.0) * log_t
    log_survival = -jnp.exp(log_shape + scale * log_t)
    return E * log_hazard, log_survival


if __name__ == "__main__":
    key = jax.random.PRNGKey(0)

    cases = [
        # (N,    D,  Z dtype,       atol, rtol)
        (8,     32, jnp.float32,   1e-4, 1e-5),   # single tiny block (padded)
        (300,   32, jnp.float32,   1e-4, 1e-5),   # 3-step grid, padded tail
        (40,    33, jnp.float32,   1e-4, 1e-5),   # odd feature dim, no D pad
        (9000,  32, jnp.float32,   1e-4, 1e-5),   # multi-step grid, partial tail block
        (300,   32, jnp.bfloat16,  5e-2, 5e-2),   # bf16-Z fast path
    ]

    for N, D, z_dtype, atol, rtol in cases:
        k_z, k_t, k_e, k_a, k_b, k_a0, k_b0, key = jax.random.split(key, 8)

        Z = jax.random.normal(k_z, (N, D), dtype=jnp.float32) * 0.5
        T = jax.random.uniform(k_t, (N,), dtype=jnp.float32, minval=0.5, maxval=5.0)
        E = (jax.random.uniform(k_e, (N,)) > 0.5).astype(jnp.float32)

        # Module inits params to zeros; use small deterministic values instead
        # so the kernel exercises the full compute path.
        alpha = jax.random.normal(k_a, (D,), dtype=jnp.float32) * 0.05
        beta = jax.random.normal(k_b, (D,), dtype=jnp.float32) * 0.05
        alpha0 = jax.random.normal(k_a0, (), dtype=jnp.float32) * 0.05
        beta0 = jax.random.normal(k_b0, (), dtype=jnp.float32) * 0.05

        Z_in = Z.astype(z_dtype)
        e_lh, ls = weibull_forward(E, T, Z_in, alpha0, alpha, beta0, beta)
        jax.block_until_ready((e_lh, ls))

        e_lh_ref, ls_ref = weibull_forward_ref(
            E, T, Z_in.astype(jnp.float32), alpha0, alpha, beta0, beta)

        assert e_lh.shape == (N,) and ls.shape == (N,)
        assert bool(jnp.all(jnp.isfinite(e_lh))) and bool(jnp.all(jnp.isfinite(ls)))
        assert jnp.allclose(e_lh, e_lh_ref, atol=atol, rtol=rtol), (N, D, str(z_dtype))
        assert jnp.allclose(ls, ls_ref, atol=atol, rtol=rtol), (N, D, str(z_dtype))

    print("KERNEL_OK")
</pallas_src>

<mosaic_0001>
module attributes {stable_mosaic.version = 11 : i64} {
  func.func @_weibull_kernel(%arg0: i32, %arg1: memref<2xf32, #tpu.memory_space<smem>>, %arg2: memref<8x32xf32, #tpu.memory_space<vmem>>, %arg3: memref<128x32xf32, #tpu.memory_space<vmem>>, %arg4: memref<2x128xf32, #tpu.memory_space<vmem>>, %arg5: memref<1x128xf32, #tpu.memory_space<vmem>>, %arg6: memref<1x128xf32, #tpu.memory_space<vmem>>) attributes {dimension_semantics = [#tpu.dimension_semantics<parallel>], iteration_bounds = array<i64: 1>, scalar_prefetch = 0 : i64, scratch_operands = 0 : i64, tpu.core_type = #tpu.core_type<tc>, window_params = [{transform_indices = @transform_0, window_bounds = array<i64: 2>}, {pipeline_mode = #tpu.pipeline_mode<synchronous>, transform_indices = @transform_1, window_bounds = array<i64: 8, 32>}, {transform_indices = @transform_2, window_bounds = array<i64: 128, 32>}, {transform_indices = @transform_3, window_bounds = array<i64: 2, 128>}, {transform_indices = @transform_4, window_bounds = array<i64: 1, 128>}, {transform_indices = @transform_5, window_bounds = array<i64: 1, 128>}]} {
    %c0 = arith.constant 0 : index
    %c0_0 = arith.constant 0 : index
    %0 = vector.load %arg2[%c0, %c0_0] : memref<8x32xf32, #tpu.memory_space<vmem>>, vector<8x32xf32>
    %c0_1 = arith.constant 0 : index
    %c0_2 = arith.constant 0 : index
    %1 = vector.load %arg3[%c0_1, %c0_2] : memref<128x32xf32, #tpu.memory_space<vmem>>, vector<128x32xf32>
    %cst = arith.constant dense<0.000000e+00> : vector<8x128xf32>
    %2 = tpu.matmul %0, %1, %cst {dimension_numbers = #tpu.dot_dimension_numbers<[1], [1], [0], [0], [0, 0, 1, 0], [], []>} : vector<8x32xf32>, vector<128x32xf32>, vector<8x128xf32> -> vector<8x128xf32>
    %3 = vector.extract_strided_slice %2 {offsets = [0, 0], sizes = [1, 128], strides = [1, 1]} : vector<8x128xf32> to vector<1x128xf32>
    %c0_3 = arith.constant 0 : index
    %4 = memref.load %arg1[%c0_3] : memref<2xf32, #tpu.memory_space<smem>>
    %5 = vector.broadcast %4 : f32 to vector<1x128xf32>
    %6 = arith.addf %3, %5 : vector<1x128xf32>
    %7 = vector.extract_strided_slice %2 {offsets = [1, 0], sizes = [1, 128], strides = [1, 1]} : vector<8x128xf32> to vector<1x128xf32>
    %c1 = arith.constant 1 : index
    %8 = memref.load %arg1[%c1] : memref<2xf32, #tpu.memory_space<smem>>
    %9 = vector.broadcast %8 : f32 to vector<1x128xf32>
    %10 = arith.addf %7, %9 : vector<1x128xf32>
    %c0_4 = arith.constant 0 : index
    %c0_5 = arith.constant 0 : index
    %11 = vector.load %arg4[%c0_4, %c0_5] : memref<2x128xf32, #tpu.memory_space<vmem>>, vector<1x128xf32>
    %c1_6 = arith.constant 1 : index
    %c0_7 = arith.constant 0 : index
    %12 = vector.load %arg4[%c1_6, %c0_7] : memref<2x128xf32, #tpu.memory_space<vmem>>, vector<1x128xf32>
    %13 = math.log %12 : vector<1x128xf32>
    %14 = math.exp %6 : vector<1x128xf32>
    %15 = arith.mulf %14, %13 : vector<1x128xf32>
    %16 = arith.addf %10, %15 : vector<1x128xf32>
    %17 = arith.subf %6, %13 : vector<1x128xf32>
    %18 = arith.addf %16, %17 : vector<1x128xf32>
    %19 = arith.mulf %11, %18 : vector<1x128xf32>
    %c0_8 = arith.constant 0 : index
    %c0_9 = arith.constant 0 : index
    %20 = vector.load %arg5[%c0_8, %c0_9] : memref<1x128xf32, #tpu.memory_space<vmem>>, vector<1x128xf32>
    tpu.vector_store %arg5[%c0_8, %c0_9], %19 {strides = array<i32>} : memref<1x128xf32, #tpu.memory_space<vmem>>, vector<1x128xf32>,
    %21 = math.exp %16 : vector<1x128xf32>
    %cst_10 = arith.constant 0.000000e+00 : f32
    %22 = vector.broadcast %cst_10 : f32 to vector<1x128xf32>
    %23 = arith.subf %22, %21 : vector<1x128xf32>
    %c0_11 = arith.constant 0 : index
    %c0_12 = arith.constant 0 : index
    %24 = vector.load %arg6[%c0_11, %c0_12] : memref<1x128xf32, #tpu.memory_space<vmem>>, vector<1x128xf32>
    tpu.vector_store %arg6[%c0_11, %c0_12], %23 {strides = array<i32>} : memref<1x128xf32, #tpu.memory_space<vmem>>, vector<1x128xf32>,
    return
  }
  func.func @transform_0(%arg0: i32) -> i32 {
    %c0_i32 = arith.constant 0 : i32
    %c0_i32_0 = arith.constant 0 : i32
    return %c0_i32 : i32
  }
  func.func @transform_1(%arg0: i32) -> (i32, i32) {
    %c0_i32 = arith.constant 0 : i32
    %c0_i32_0 = arith.constant 0 : i32
    %c0_i32_1 = arith.constant 0 : i32
    return %c0_i32, %c0_i32_0 : i32, i32
  }
  func.func @transform_2(%arg0: i32) -> (i32, i32) {
    %c0_i32 = arith.constant 0 : i32
    %c0_i32_0 = arith.constant 0 : i32
    return %arg0, %c0_i32 : i32, i32
  }
  func.func @transform_3(%arg0: i32) -> (i32, i32) {
    %c0_i32 = arith.constant 0 : i32
    %c0_i32_0 = arith.constant 0 : i32
    return %c0_i32, %arg0 : i32, i32
  }
  func.func @transform_4(%arg0: i32) -> (i32, i32) {
    %c0_i32 = arith.constant 0 : i32
    %c0_i32_0 = arith.constant 0 : i32
    return %c0_i32, %arg0 : i32, i32
  }
  func.func @transform_5(%arg0: i32) -> (i32, i32) {
    %c0_i32 = arith.constant 0 : i32
    %c0_i32_0 = arith.constant 0 : i32
    return %c0_i32, %arg0 : i32, i32
  }
}

</mosaic_0001>

<llo_original>
// kernel: tpu_custom_call.1
$region0: #{tpu_custom_call.1}
  #allocation0 [shape = 'u32[]', space=smem, size = 0x4, offset = 0x4, fixed_abs, tag = 'smem constant byte address 0x4 - core index']
  #allocation1 [shape = 'u32[72,128]{1,0:T(1,128)}', space=vmem, size = 0x9000, scoped, tag = 'internal scratch']
  %s0 = inlined_call_operand.vmem [shape: f32[2], index: 0, kind: input, shape index: {}]
  %s1 = inlined_call_operand.vmem [shape: f32[8,32], index: 1, kind: input, shape index: {}]
  %s2 = inlined_call_operand.vmem [shape: f32[128,32], index: 2, kind: input, shape index: {}]
  %s3 = inlined_call_operand.vmem [shape: f32[2,128], index: 3, kind: input, shape index: {}]
  %s4 = inlined_call_operand.hbm [shape: f32[1,128], index: 4, kind: output, shape index: {0}]
  %s5 = inlined_call_operand.hbm [shape: f32[1,128], index: 5, kind: output, shape index: {1}]
  %6 = xla_tuple %s4, %s5
  %s7 = sld [smem:[#allocation0]]
  $region38: #{tpu_custom_call.1} parent=0
    _
  %s9 = ssub.s32 1, %s7
  %s10 = scalar_select 0, %s9, %s7
  $region1: #{tpu_custom_call.1} parent=0
    #allocation2 [shape = 'u8[512]{0}', space=smem, size = 0x200, scoped, tag = 'input window, operand 0, single buffered']
    #allocation3 [shape = 's32[1]{0}', space=sflag, size = 0x4, scoped, tag = 'scoped memory for tpu_custom_call.1']
    #allocation4 [shape = 's32[1]{0}', space=sflag, size = 0x4, scoped, tag = 'scoped memory for tpu_custom_call.1']
    #allocation5 [shape = 'u8[512]{0}', space=vmem, size = 0x400, scoped, tag = 'output window, operand 0, single buffered']
    #allocation6 [shape = 'u8[512]{0}', space=vmem, size = 0x400, scoped, tag = 'output window, operand 1, single buffered']
    #allocation7 [shape = 's32[1]{0}', space=sflag, size = 0x4, scoped, tag = 'scoped memory for tpu_custom_call.1']
    %11 = vsyncpa [#allocation4], 0
    %12 = vsyncpa [#allocation3], 0
    %13 = vsyncpa [#allocation7], 0
    // Predicated region
    $region2: #{tpu_custom_call.1} parent=1 // pred_check
      _
    $region3: #{tpu_custom_call.1} parent=1 // pred_check_branch
      %15 = sbr.rel (0) target = $region5
    $region4: #{tpu_custom_call.1} parent=1 // pred_region
      %17 = vsyncadd [#allocation4], 0
      %s19 = sshll.u32 %s0, 4
      %s20 = int_to_ptr.vmem [resolvable:$true] %s19
      %22 = dma.vmem_to_smem %s20, 16, [#allocation2], [#allocation4]
    $region5: #{tpu_custom_call.1} parent=1 // pred_fallthru
      _
    // Predicated region
    $region6: #{tpu_custom_call.1} parent=1 // pred_check
      _
    $region7: #{tpu_custom_call.1} parent=1 // pred_check_branch
      %24 = sbr.rel (0) target = $region9
    $region8: #{tpu_custom_call.1} parent=1 // pred_region
      _
    $region9: #{tpu_custom_call.1} parent=1 // pred_fallthru
      _
    // Predicated region
    $region10: #{tpu_custom_call.1} parent=1 // pred_check
      _
    $region11: #{tpu_custom_call.1} parent=1 // pred_check_branch
      %26 = sbr.rel (0) target = $region13
    $region12: #{tpu_custom_call.1} parent=1 // pred_region
      _
    $region13: #{tpu_custom_call.1} parent=1 // pred_fallthru
      _
    // Predicated region
    $region14: #{tpu_custom_call.1} parent=1 // pred_check
      _
    $region15: #{tpu_custom_call.1} parent=1 // pred_check_branch
      %28 = sbr.rel (0) target = $region17
    $region16: #{tpu_custom_call.1} parent=1 // pred_region
      _
    $region17: #{tpu_custom_call.1} parent=1 // pred_fallthru
      _
    // Predicated region
    $region18: #{tpu_custom_call.1} parent=1 // pred_check
      _
    $region19: #{tpu_custom_call.1} parent=1 // pred_check_branch
      %30 = sbr.rel (0) target = $region21
    $region20: #{tpu_custom_call.1} parent=1 // pred_region
      %32 = dma.done [#allocation4], 16
    $region21: #{tpu_custom_call.1} parent=1 // pred_fallthru
      _
    %33 = sfence
    %v34 = vld [vmem:[%s1] sm:$0xff]
    %v35 = vld [vmem:[%s2] sm:$0xff]
    %v36 = vld [vmem:[%s2 + $0x8] sm:$0xff]
    %v37 = vld [vmem:[%s2 + $0x10] sm:$0xff]
    %v38 = vld [vmem:[%s2 + $0x18] sm:$0xff]
    %v39 = vld [vmem:[%s2 + $0x20] sm:$0xff]
    %v40 = vld [vmem:[%s2 + $0x28] sm:$0xff]
    %v41 = vld [vmem:[%s2 + $0x30] sm:$0xff]
    %v42 = vld [vmem:[%s2 + $0x38] sm:$0xff]
    %v43 = vld [vmem:[%s2 + $0x40] sm:$0xff]
    %v44 = vld [vmem:[%s2 + $0x48] sm:$0xff]
    %v45 = vld [vmem:[%s2 + $0x50] sm:$0xff]
    %v46 = vld [vmem:[%s2 + $0x58] sm:$0xff]
    %v47 = vld [vmem:[%s2 + $0x60] sm:$0xff]
    %v48 = vld [vmem:[%s2 + $0x68] sm:$0xff]
    %v49 = vld [vmem:[%s2 + $0x70] sm:$0xff]
    %v50 = vld [vmem:[%s2 + $0x78] sm:$0xff]
    %vm51 = vcmask 261120
    %v53 = vsel %vm51, %v34, 0
    %v56 = vsel %vm51, %v35, 0
    %v59 = vsel %vm51, %v36, 0
    %v62 = vsel %vm51, %v37, 0
    %v65 = vsel %vm51, %v38, 0
    %v68 = vsel %vm51, %v39, 0
    %v71 = vsel %vm51, %v40, 0
    %v74 = vsel %vm51, %v41, 0
    %v77 = vsel %vm51, %v42, 0
    %v80 = vsel %vm51, %v43, 0
    %v83 = vsel %vm51, %v44, 0
    %v86 = vsel %vm51, %v45, 0
    %v89 = vsel %vm51, %v46, 0
    %v92 = vsel %vm51, %v47, 0
    %v95 = vsel %vm51, %v48, 0
    %v98 = vsel %vm51, %v49, 0
    %v101 = vsel %vm51, %v50, 0
    %103 = vmatpush.xpose.msra.mxu0 %v101
    %104 = vmatpush.xpose.msra.mxu0 %v98
    %105 = vmatpush.xpose.msra.mxu0 %v95
    %106 = vmatpush.xpose.msra.mxu0 %v92
    %107 = vmatpush.xpose.msra.mxu0 %v89
    %108 = vmatpush.xpose.msra.mxu0 %v86
    %109 = vmatpush.xpose.msra.mxu0 %v83
    %110 = vmatpush.xpose.msra.mxu0 %v80
    %111 = vmatpush.xpose.msra.mxu0 %v77
    %112 = vmatpush.xpose.msra.mxu0 %v74
    %113 = vmatpush.xpose.msra.mxu0 %v71
    %114 = vmatpush.xpose.msra.mxu0 %v68
    %115 = vmatpush.xpose.msra.mxu0 %v65
    %116 = vmatpush.xpose.msra.mxu0 %v62
    %117 = vmatpush.xpose.msra.mxu0 %v59
    %118 = vmatpush.xpose.msra.mxu0 %v56
    %119 = vmatmul.f32.gmra.mxu0 %v53
    %v120 = vpop.f32.mrf.mxu0
    %v121 = vadd.f32 0.0, %v120
    %122 = vdwg.mxu0
    %s123 = sld [smem:[#allocation2]]
    %v124 = vstv %s123
    %v125 = vadd.f32 %v121, %v124
    %s126 = sld [smem:[#allocation2 + $0x1]]
    %v127 = vstv %s126
    %v128 = vadd.f32 %v121, %v127
    %v129 = vld [vmem:[%s3] sm:$0x1]
    %v130 = vld [vmem:[%s3 + $0x1] sm:$0x1]
    %v131 = vlog2.pop %v130
    %v132 = vmul.f32 %v131, 0.6931472
    %v133 = vmul.f32 %v125, 1.442695
    %v134 = vpow.pop %v133
    %v135 = vmul.f32 %v134, %v132
    %v137 = vrot.slane %v135, 7
    %v139 = vadd.f32 %v128, %v137
    %v140 = vsub.f32 %v125, %v132
    %v142 = vrot.slane %v140, 7
    %v144 = vadd.f32 %v139, %v142
    %v146 = vrot.slane %v144, 1
    %v148 = vmul.f32 %v129, %v146
    %149 = vst [vmem:[#allocation5] sm:$0x1] %v148
    %v150 = vmul.f32 %v139, 1.442695
    %v151 = vpow.pop %v150
    %v152 = vsub.f32 0.0, %v151
    %153 = vst [vmem:[#allocation6 - $0x1] sm:$0x2] %v152
    // Predicated region
    $region22: #{tpu_custom_call.1} parent=1 // pred_check
      _
    $region23: #{tpu_custom_call.1} parent=1 // pred_check_branch
      %155 = sbr.rel (0) target = $region25
    $region24: #{tpu_custom_call.1} parent=1 // pred_region
      %157 = vsyncadd [#allocation3], 0
      %s159 = sshll.u32 [#allocation5], 4
      %s160 = int_to_ptr.vmem [resolvable:$true] %s159
      %s161 = sshll.u32 %s4, 4
      %s162 = int_to_ptr.hbm [resolvable:$true] %s161
      %164 = dma.vmem_to_hbm [thread:$0]  %s160, 16, %s162, [#allocation3]
    $region25: #{tpu_custom_call.1} parent=1 // pred_fallthru
      _
    // Predicated region
    $region26: #{tpu_custom_call.1} parent=1 // pred_check
      _
    $region27: #{tpu_custom_call.1} parent=1 // pred_check_branch
      %166 = sbr.rel (0) target = $region29
    $region28: #{tpu_custom_call.1} parent=1 // pred_region
      %168 = vsyncadd [#allocation7], 0
      %s170 = sshll.u32 [#allocation6], 4
      %s171 = int_to_ptr.vmem [resolvable:$true] %s170
      %s172 = sshll.u32 %s5, 4
      %s173 = int_to_ptr.hbm [resolvable:$true] %s172
      %175 = dma.vmem_to_hbm [thread:$0]  %s171, 16, %s173, [#allocation7]
    $region29: #{tpu_custom_call.1} parent=1 // pred_fallthru
      _
    // Predicated region
    $region30: #{tpu_custom_call.1} parent=1 // pred_check
      _
    $region31: #{tpu_custom_call.1} parent=1 // pred_check_branch
      %177 = sbr.rel (0) target = $region33
    $region32: #{tpu_custom_call.1} parent=1 // pred_region
      %179 = dma.done [#allocation3], 16
    $region33: #{tpu_custom_call.1} parent=1 // pred_fallthru
      _
    // Predicated region
    $region34: #{tpu_custom_call.1} parent=1 // pred_check
      _
    $region35: #{tpu_custom_call.1} parent=1 // pred_check_branch
      %181 = sbr.rel (0) target = $region37
    $region36: #{tpu_custom_call.1} parent=1 // pred_region
      %183 = dma.done [#allocation7], 16
    $region37: #{tpu_custom_call.1} parent=1 // pred_fallthru
      _
    %184 = vsyncpa [#allocation3], 1
    %185 = vsyncpa [#allocation7], 1
    %186 = vsyncpa [#allocation4], 1

</llo_original>
